<compile_context>
chip_gen: v7x
topology: tpu7x:2x2x1
jax: 0.10.0
libtpu: 0.0.40
codegen_flags: <defaults>
</compile_context>

<pallas_src>
import functools

import jax
import jax.numpy as jnp
from jax.experimental import pallas as pl
from jax.experimental.pallas import tpu as pltpu


def _conv1d_glu_kernel(xpad_ref, w_ref, b_ref, res_ref, out_ref, *,
                       kernel_size, out_channels):
    # Block shapes (leading batch dim of size 1 on xpad/res/out):
    #   xpad_ref: (1, C_in, T + K - 1)     w_ref: (K, 2*C_out, C_in)
    #   b_ref:    (2*C_out, 1)             res_ref/out_ref: (1, C*, T)
    T = out_ref.shape[2]
    x = xpad_ref[0]                                        # (C_in, T+K-1), input dtype

    acc = jnp.zeros((2 * out_channels, T), jnp.float32)
    for k in range(kernel_size):                           # K is small & static: unrolled
        x_k = x[:, k:k + T]                                # static halo slice, (C_in, T)
        w_k = w_ref[k]                                     # (2*C_out, C_in), native layout
        acc += jnp.dot(w_k, x_k, preferred_element_type=jnp.float32)

    acc += b_ref[...].astype(jnp.float32)                  # broadcast (2*C_out,1) over T

    x1 = acc[:out_channels]                                # static split along sublanes
    x2 = acc[out_channels:]
    gated = x1 * jax.nn.sigmoid(x2)                        # sigmoid -> EUP slot

    out_ref[0] = (res_ref[0].astype(jnp.float32) + gated).astype(out_ref.dtype)


def conv1d_glu(x, weight, bias, *, kernel_size, out_channels, dropout=0.0):
    """Pallas implementation of Conv1dGLU.forward (eval mode)."""
    del dropout  # identity in eval mode
    B, C_in, T = x.shape
    K = kernel_size
    assert K % 2 == 1, "Conv1dGLU uses odd kernel sizes ('same' padding)"
    assert weight.shape == (2 * out_channels, C_in, K)
    assert bias.shape == (2 * out_channels,)
    assert C_in == out_channels, "residual add requires in_channels == out_channels"
    pad = (K - 1) // 2

    # Cheap wrapper-side layout prep (XLA ops, outside the kernel):
    x_pad = jnp.pad(x, ((0, 0), (0, 0), (pad, pad)))           # (B, C_in, T+K-1)
    w_kfirst = jnp.transpose(weight, (2, 0, 1))                # (K, 2*C_out, C_in)
    b_col = bias.reshape(2 * out_channels, 1)                  # (2*C_out, 1)

    kernel = functools.partial(_conv1d_glu_kernel,
                               kernel_size=K, out_channels=out_channels)

    itemsize = jnp.dtype(x.dtype).itemsize
    cost = pl.CostEstimate(
        flops=2 * B * (2 * out_channels) * C_in * K * T,
        transcendentals=B * out_channels * T,
        bytes_accessed=(x_pad.size + w_kfirst.size + b_col.size + x.size
                        + B * out_channels * T) * itemsize,
    )

    out = pl.pallas_call(
        kernel,
        out_shape=jax.ShapeDtypeStruct((B, out_channels, T), x.dtype),
        grid=(B,),
        in_specs=[
            pl.BlockSpec((1, C_in, T + 2 * pad), lambda b: (b, 0, 0)),       # padded x
            pl.BlockSpec((K, 2 * out_channels, C_in), lambda b: (0, 0, 0)),  # weights
            pl.BlockSpec((2 * out_channels, 1), lambda b: (0, 0)),           # bias
            pl.BlockSpec((1, C_in, T), lambda b: (b, 0, 0)),                 # residual
        ],
        out_specs=pl.BlockSpec((1, out_channels, T), lambda b: (b, 0, 0)),
        compiler_params=pltpu.CompilerParams(dimension_semantics=("parallel",)),
        cost_estimate=cost,
    )(x_pad, w_kfirst, b_col, x)
    return out


def _reference(x, weight, bias, kernel_size, out_channels):
    """Pure-JAX reference matching the torch module in eval mode."""
    pad = (kernel_size - 1) // 2
    y = jax.lax.conv_general_dilated(
        x.astype(jnp.float32), weight.astype(jnp.float32),
        window_strides=(1,), padding=[(pad, pad)],
        dimension_numbers=("NCH", "OIH", "NCH"))
    y = y + bias.astype(jnp.float32)[None, :, None]
    x1 = y[:, :out_channels]
    x2 = y[:, out_channels:]
    return x.astype(jnp.float32) + x1 * jax.nn.sigmoid(x2)


if __name__ == "__main__":
    key = jax.random.PRNGKey(0)
    kx, kw, kb = jax.random.split(key, 3)

    B, C, T, K = 2, 4, 16, 3           # in_channels == out_channels == 4
    dropout = 0.1                       # identity in eval mode

    x = jax.random.normal(kx, (B, C, T), dtype=jnp.float32)
    weight = 0.1 * jax.random.normal(kw, (2 * C, C, K), dtype=jnp.float32)
    bias = 0.1 * jax.random.normal(kb, (2 * C,), dtype=jnp.float32)

    out = conv1d_glu(x, weight, bias, kernel_size=K, out_channels=C,
                     dropout=dropout)
    jax.block_until_ready(out)

    ref = _reference(x, weight, bias, K, C)
    assert out.shape == (B, C, T)
    assert jnp.allclose(out, ref, atol=1e-5, rtol=1e-5)

    print("KERNEL_OK")
</pallas_src>

<mosaic_0001>
module attributes {stable_mosaic.version = 11 : i64} {
  func.func @_conv1d_glu_kernel(%arg0: i32, %arg1: memref<1x4x18xf32, #tpu.memory_space<vmem>>, %arg2: memref<3x8x4xf32, #tpu.memory_space<vmem>>, %arg3: memref<8x1xf32, #tpu.memory_space<vmem>>, %arg4: memref<1x4x16xf32, #tpu.memory_space<vmem>>, %arg5: memref<1x4x16xf32, #tpu.memory_space<vmem>>) attributes {dimension_semantics = [#tpu.dimension_semantics<parallel>], iteration_bounds = array<i64: 2>, scalar_prefetch = 0 : i64, scratch_operands = 0 : i64, tpu.core_type = #tpu.core_type<tc>, window_params = [{transform_indices = @transform_0, window_bounds = array<i64: 1, 4, 18>}, {pipeline_mode = #tpu.pipeline_mode<synchronous>, transform_indices = @transform_1, window_bounds = array<i64: 3, 8, 4>}, {pipeline_mode = #tpu.pipeline_mode<synchronous>, transform_indices = @transform_2, window_bounds = array<i64: 8, 1>}, {transform_indices = @transform_3, window_bounds = array<i64: 1, 4, 16>}, {transform_indices = @transform_4, window_bounds = array<i64: 1, 4, 16>}]} {
    %c0 = arith.constant 0 : index
    %c0_0 = arith.constant 0 : index
    %c0_1 = arith.constant 0 : index
    %0 = vector.load %arg1[%c0, %c0_0, %c0_1] : memref<1x4x18xf32, #tpu.memory_space<vmem>>, vector<1x4x18xf32>
    %1 = vector.shape_cast %0 : vector<1x4x18xf32> to vector<4x18xf32>
    %cst = arith.constant 0.000000e+00 : f32
    %2 = vector.broadcast %cst : f32 to vector<8x16xf32>
    %3 = vector.extract_strided_slice %1 {offsets = [0, 0], sizes = [4, 16], strides = [1, 1]} : vector<4x18xf32> to vector<4x16xf32>
    %c0_2 = arith.constant 0 : index
    %c0_3 = arith.constant 0 : index
    %c0_4 = arith.constant 0 : index
    %4 = vector.load %arg2[%c0_2, %c0_3, %c0_4] : memref<3x8x4xf32, #tpu.memory_space<vmem>>, vector<1x8x4xf32>
    %5 = vector.shape_cast %4 : vector<1x8x4xf32> to vector<8x4xf32>
    %cst_5 = arith.constant dense<0.000000e+00> : vector<8x16xf32>
    %6 = tpu.matmul %5, %3, %cst_5 {dimension_numbers = #tpu.dot_dimension_numbers<[1], [0], [0], [1], [0, 0, 1, 1], [], []>} : vector<8x4xf32>, vector<4x16xf32>, vector<8x16xf32> -> vector<8x16xf32>
    %7 = arith.addf %2, %6 : vector<8x16xf32>
    %8 = vector.extract_strided_slice %1 {offsets = [0, 1], sizes = [4, 16], strides = [1, 1]} : vector<4x18xf32> to vector<4x16xf32>
    %c1 = arith.constant 1 : index
    %c0_6 = arith.constant 0 : index
    %c0_7 = arith.constant 0 : index
    %9 = vector.load %arg2[%c1, %c0_6, %c0_7] : memref<3x8x4xf32, #tpu.memory_space<vmem>>, vector<1x8x4xf32>
    %10 = vector.shape_cast %9 : vector<1x8x4xf32> to vector<8x4xf32>
    %cst_8 = arith.constant dense<0.000000e+00> : vector<8x16xf32>
    %11 = tpu.matmul %10, %8, %cst_8 {dimension_numbers = #tpu.dot_dimension_numbers<[1], [0], [0], [1], [0, 0, 1, 1], [], []>} : vector<8x4xf32>, vector<4x16xf32>, vector<8x16xf32> -> vector<8x16xf32>
    %12 = arith.addf %7, %11 : vector<8x16xf32>
    %13 = vector.extract_strided_slice %1 {offsets = [0, 2], sizes = [4, 16], strides = [1, 1]} : vector<4x18xf32> to vector<4x16xf32>
    %c2 = arith.constant 2 : index
    %c0_9 = arith.constant 0 : index
    %c0_10 = arith.constant 0 : index
    %14 = vector.load %arg2[%c2, %c0_9, %c0_10] : memref<3x8x4xf32, #tpu.memory_space<vmem>>, vector<1x8x4xf32>
    %15 = vector.shape_cast %14 : vector<1x8x4xf32> to vector<8x4xf32>
    %cst_11 = arith.constant dense<0.000000e+00> : vector<8x16xf32>
    %16 = tpu.matmul %15, %13, %cst_11 {dimension_numbers = #tpu.dot_dimension_numbers<[1], [0], [0], [1], [0, 0, 1, 1], [], []>} : vector<8x4xf32>, vector<4x16xf32>, vector<8x16xf32> -> vector<8x16xf32>
    %17 = arith.addf %12, %16 : vector<8x16xf32>
    %c0_12 = arith.constant 0 : index
    %c0_13 = arith.constant 0 : index
    %18 = vector.load %arg3[%c0_12, %c0_13] : memref<8x1xf32, #tpu.memory_space<vmem>>, vector<8x1xf32>
    %19 = vector.broadcast %18 : vector<8x1xf32> to vector<8x16xf32>
    %20 = arith.addf %17, %19 : vector<8x16xf32>
    %21 = vector.extract_strided_slice %20 {offsets = [0, 0], sizes = [4, 16], strides = [1, 1]} : vector<8x16xf32> to vector<4x16xf32>
    %22 = vector.extract_strided_slice %20 {offsets = [4, 0], sizes = [4, 16], strides = [1, 1]} : vector<8x16xf32> to vector<4x16xf32>
    %23 = arith.negf %22 : vector<4x16xf32>
    %24 = math.exp %23 : vector<4x16xf32>
    %cst_14 = arith.constant 1.000000e+00 : f32
    %25 = vector.broadcast %cst_14 : f32 to vector<4x16xf32>
    %26 = arith.addf %25, %24 : vector<4x16xf32>
    %27 = arith.divf %25, %26 : vector<4x16xf32>
    %28 = arith.mulf %21, %27 : vector<4x16xf32>
    %c0_15 = arith.constant 0 : index
    %c0_16 = arith.constant 0 : index
    %c0_17 = arith.constant 0 : index
    %29 = vector.load %arg4[%c0_15, %c0_16, %c0_17] : memref<1x4x16xf32, #tpu.memory_space<vmem>>, vector<1x4x16xf32>
    %30 = vector.shape_cast %29 : vector<1x4x16xf32> to vector<4x16xf32>
    %31 = arith.addf %30, %28 : vector<4x16xf32>
    %c0_18 = arith.constant 0 : index
    %c0_19 = arith.constant 0 : index
    %c0_20 = arith.constant 0 : index
    %32 = vector.load %arg5[%c0_18, %c0_19, %c0_20] : memref<1x4x16xf32, #tpu.memory_space<vmem>>, vector<1x4x16xf32>
    %33 = vector.shape_cast %32 : vector<1x4x16xf32> to vector<4x16xf32>
    %34 = vector.shape_cast %31 : vector<4x16xf32> to vector<1x4x16xf32>
    tpu.vector_store %arg5[%c0_18, %c0_19, %c0_20], %34 {strides = array<i32>} : memref<1x4x16xf32, #tpu.memory_space<vmem>>, vector<1x4x16xf32>,
    return
  }
  func.func @transform_0(%arg0: i32) -> (i32, i32, i32) {
    %c0_i32 = arith.constant 0 : i32
    %c0_i32_0 = arith.constant 0 : i32
    %c0_i32_1 = arith.constant 0 : i32
    return %arg0, %c0_i32, %c0_i32_0 : i32, i32, i32
  }
  func.func @transform_1(%arg0: i32) -> (i32, i32, i32) {
    %c0_i32 = arith.constant 0 : i32
    %c0_i32_0 = arith.constant 0 : i32
    %c0_i32_1 = arith.constant 0 : i32
    %c0_i32_2 = arith.constant 0 : i32
    return %c0_i32, %c0_i32_0, %c0_i32_1 : i32, i32, i32
  }
  func.func @transform_2(%arg0: i32) -> (i32, i32) {
    %c0_i32 = arith.constant 0 : i32
    %c0_i32_0 = arith.constant 0 : i32
    %c0_i32_1 = arith.constant 0 : i32
    return %c0_i32, %c0_i32_0 : i32, i32
  }
  func.func @transform_3(%arg0: i32) -> (i32, i32, i32) {
    %c0_i32 = arith.constant 0 : i32
    %c0_i32_0 = arith.constant 0 : i32
    %c0_i32_1 = arith.constant 0 : i32
    return %arg0, %c0_i32, %c0_i32_0 : i32, i32, i32
  }
  func.func @transform_4(%arg0: i32) -> (i32, i32, i32) {
    %c0_i32 = arith.constant 0 : i32
    %c0_i32_0 = arith.constant 0 : i32
    %c0_i32_1 = arith.constant 0 : i32
    return %arg0, %c0_i32, %c0_i32_0 : i32, i32, i32
  }
}

</mosaic_0001>

<llo_original>
// kernel: tpu_custom_call.1
$region0: #{tpu_custom_call.1}
  #allocation0 [shape = 'u32[]', space=smem, size = 0x4, offset = 0x4, fixed_abs, tag = 'smem constant byte address 0x4 - core index']
  #allocation1 [shape = 'u32[144,128]{1,0:T(1,128)}', space=vmem, size = 0x12000, scoped, tag = 'internal scratch']
  %s0 = inlined_call_operand.vmem [shape: f32[2,4,18], index: 0, kind: input, shape index: {}]
  %s1 = inlined_call_operand.vmem [shape: f32[3,8,4], index: 1, kind: input, shape index: {}]
  %s2 = inlined_call_operand.vmem [shape: f32[8,1], index: 2, kind: input, shape index: {}]
  %s3 = inlined_call_operand.vmem [shape: f32[2,4,16], index: 3, kind: input, shape index: {}]
  %s4 = inlined_call_operand.hbm [shape: f32[2,4,16], index: 4, kind: output, shape index: {}]
  %s5 = sld [smem:[#allocation0]]
  $region49: #{tpu_custom_call.1} parent=0
    _
  %s7 = ssub.s32 1, %s5
  %s8 = scalar_select 0, %s7, %s5
  $region1: #{tpu_custom_call.1} parent=0
    #allocation2 [shape = 'u8[4096]{0}', space=vmem, size = 0x1000, scoped, tag = 'output window, operand 0']
    #allocation3 [shape = 's32[2]{0}', space=sflag, size = 0x8, scoped, tag = 'scoped memory for tpu_custom_call.1']
    %9 = vsyncpa [#allocation3], 0
    %s10 = scalar_lea.sflag [#allocation3], 1
    %11 = vsyncpa %s10, 0
    loop: start=0, step=1, limit=4
    $region2: #{tpu_custom_call.1} parent=1 // loop_pre_header
      _
    $region3: #{tpu_custom_call.1} parent=1 // loop_header
      %s13 = sphi 0, %s17
      %p14 = scmp.ge.s32.totalorder %s13, 4
      %s23 = sphi 0, %s25
      %s26 = sphi 0, %s23
      %s27 = sphi 0, %s26
      %s43 = sphi 0, %s27
      %s47 = sphi 0, %s47
      %s49 = sphi 0, %s47
      %s50 = sphi 0, %s49
      %s64 = sphi 0, %s50
      %s68 = sphi 0, %s68
      %s70 = sphi 0, %s68
      %s71 = sphi 0, %s70
      %s85 = sphi 0, %s71
      %s91 = sphi 0, %s93
      %s94 = sphi 0, %s91
      %s95 = sphi 0, %s94
      %s111 = sphi 0, %s95
      %s117 = sphi 0, %s119
      %s120 = sphi 0, %s117
      %s121 = sphi 0, %s120
      %s137 = sphi 0, %s121
    $region4: #{tpu_custom_call.1} parent=1 // loop_header_branch
      %16 = sbr.rel (%p14) target = $region8
    $region5: #{tpu_custom_call.1} parent=1 // loop_body
      %s18 = ssub.s32 %s13, 1
      %s19 = ssub.s32 %s13, 2
      %s20 = sadd.s32 %s13, 1
      %s21 = ssub.s32 %s13, %s20
      %p22 = scmp.eq.s32.totalorder %s21, 0
      %s24 = sadd.s32 %s23, 1
      %s25 = scalar_select %p22, %s23, %s24
      %p28 = pneg %p22
      %p29 = scmp.eq.s32.totalorder %s13, 1
      %p30 = por %p28, %p29
      %p31 = scmp.ne.s32.totalorder %s23, %s26
      %p32 = scmp.eq.s32.totalorder %s13, 0
      %p33 = por %p31, %p32
      %p34 = scmp.ne.s32.totalorder %s23, %s26
      %p35 = scmp.eq.s32.totalorder %s18, 1
      %p36 = por %p34, %p35
      %p37 = scmp.ne.s32.totalorder %s26, %s27
      %p38 = scmp.eq.s32.totalorder %s18, 0
      %p39 = por %p37, %p38
      %p40 = scmp.ne.s32.totalorder %s26, %s27
      %p41 = scmp.eq.s32.totalorder %s19, 1
      %p42 = por %p40, %p41
      %p44 = scmp.ne.s32.totalorder %s27, %s43
      %p45 = scmp.eq.s32.totalorder %s19, 0
      %p46 = por %p44, %p45
      %s48 = sadd.s32 %s47, 1
      %p51 = scmp.eq.s32.totalorder %s13, 1
      %p52 = scmp.ne.s32.totalorder %s47, %s49
      %p53 = scmp.eq.s32.totalorder %s13, 0
      %p54 = por %p52, %p53
      %p55 = scmp.ne.s32.totalorder %s47, %s49
      %p56 = scmp.eq.s32.totalorder %s18, 1
      %p57 = por %p55, %p56
      %p58 = scmp.ne.s32.totalorder %s49, %s50
      %p59 = scmp.eq.s32.totalorder %s18, 0
      %p60 = por %p58, %p59
      %p61 = scmp.ne.s32.totalorder %s49, %s50
      %p62 = scmp.eq.s32.totalorder %s19, 1
      %p63 = por %p61, %p62
      %p65 = scmp.ne.s32.totalorder %s50, %s64
      %p66 = scmp.eq.s32.totalorder %s19, 0
      %p67 = por %p65, %p66
      %s69 = sadd.s32 %s68, 1
      %p72 = scmp.eq.s32.totalorder %s13, 1
      %p73 = scmp.ne.s32.totalorder %s68, %s70
      %p74 = scmp.eq.s32.totalorder %s13, 0
      %p75 = por %p73, %p74
      %p76 = scmp.ne.s32.totalorder %s68, %s70
      %p77 = scmp.eq.s32.totalorder %s18, 1
      %p78 = por %p76, %p77
      %p79 = scmp.ne.s32.totalorder %s70, %s71
      %p80 = scmp.eq.s32.totalorder %s18, 0
      %p81 = por %p79, %p80
      %p82 = scmp.ne.s32.totalorder %s70, %s71
      %p83 = scmp.eq.s32.totalorder %s19, 1
      %p84 = por %p82, %p83
      %p86 = scmp.ne.s32.totalorder %s71, %s85
      %p87 = scmp.eq.s32.totalorder %s19, 0
      %p88 = por %p86, %p87
      %s89 = ssub.s32 %s13, %s20
      %p90 = scmp.eq.s32.totalorder %s89, 0
      %s92 = sadd.s32 %s91, 1
      %s93 = scalar_select %p90, %s91, %s92
      %p96 = pneg %p90
      %p97 = scmp.eq.s32.totalorder %s13, 1
      %p98 = por %p96, %p97
      %p99 = scmp.ne.s32.totalorder %s91, %s94
      %p100 = scmp.eq.s32.totalorder %s13, 0
      %p101 = por %p99, %p100
      %p102 = scmp.ne.s32.totalorder %s91, %s94
      %p103 = scmp.eq.s32.totalorder %s18, 1
      %p104 = por %p102, %p103
      %p105 = scmp.ne.s32.totalorder %s94, %s95
      %p106 = scmp.eq.s32.totalorder %s18, 0
      %p107 = por %p105, %p106
      %p108 = scmp.ne.s32.totalorder %s94, %s95
      %p109 = scmp.eq.s32.totalorder %s19, 1
      %p110 = por %p108, %p109
      %p112 = scmp.ne.s32.totalorder %s95, %s111
      %p113 = scmp.eq.s32.totalorder %s19, 0
      %p114 = por %p112, %p113
      %s115 = ssub.s32 %s13, %s20
      %p116 = scmp.eq.s32.totalorder %s115, 0
      %s118 = sadd.s32 %s117, 1
      %s119 = scalar_select %p116, %s117, %s118
      %p122 = pneg %p116
      %p123 = scmp.eq.s32.totalorder %s13, 1
      %p124 = por %p122, %p123
      %p125 = scmp.ne.s32.totalorder %s117, %s120
      %p126 = scmp.eq.s32.totalorder %s13, 0
      %p127 = por %p125, %p126
      %p128 = scmp.ne.s32.totalorder %s117, %s120
      %p129 = scmp.eq.s32.totalorder %s18, 1
      %p130 = por %p128, %p129
      %p131 = scmp.ne.s32.totalorder %s120, %s121
      %p132 = scmp.eq.s32.totalorder %s18, 0
      %p133 = por %p131, %p132
      %p134 = scmp.ne.s32.totalorder %s120, %s121
      %p135 = scmp.eq.s32.totalorder %s19, 1
      %p136 = por %p134, %p135
      %p138 = scmp.ne.s32.totalorder %s121, %s137
      %p139 = scmp.eq.s32.totalorder %s19, 0
      %p140 = por %p138, %p139
      %p141 = scmp.le.s32.totalorder 1, %s13
      %p142 = scmp.lt.s32.totalorder %s13, 3
      %p143 = pnand %p141, %p142
      %p144 = pneg %p143
      // Predicated region
      $region9: #{tpu_custom_call.1} parent=5 // pred_check
        _
      $region10: #{tpu_custom_call.1} parent=5 // pred_check_branch
        %146 = sbr.rel (%p143) target = $region12
      $region11: #{tpu_custom_call.1} parent=5 // pred_region
        %s147 = ssub.s32 %s13, 1
        // Predicated region
        $region13: #{tpu_custom_call.1} parent=11 // pred_check
          %p148 = pneg %p60
        $region14: #{tpu_custom_call.1} parent=11 // pred_check_branch
          %150 = sbr.rel (%p148) target = $region16
        $region15: #{tpu_custom_call.1} parent=11 // pred_region
          _
        $region16: #{tpu_custom_call.1} parent=11 // pred_fallthru
          _
        // Predicated region
        $region17: #{tpu_custom_call.1} parent=11 // pred_check
          %p151 = pneg %p81
        $region18: #{tpu_custom_call.1} parent=11 // pred_check_branch
          %153 = sbr.rel (%p151) target = $region20
        $region19: #{tpu_custom_call.1} parent=11 // pred_region
          _
        $region20: #{tpu_custom_call.1} parent=11 // pred_fallthru
          _
      $region12: #{tpu_custom_call.1} parent=5 // pred_fallthru
        _
      %p154 = scmp.lt.s32.totalorder %s13, 2
      // Predicated region
      $region21: #{tpu_custom_call.1} parent=5 // pred_check
        %p155 = pneg %p154
      $region22: #{tpu_custom_call.1} parent=5 // pred_check_branch
        %157 = sbr.rel (%p155) target = $region24
      $region23: #{tpu_custom_call.1} parent=5 // pred_region
        // Predicated region
        $region25: #{tpu_custom_call.1} parent=23 // pred_check
          %p158 = pneg %p33
        $region26: #{tpu_custom_call.1} parent=23 // pred_check_branch
          %160 = sbr.rel (%p158) target = $region28
        $region27: #{tpu_custom_call.1} parent=23 // pred_region
          %p161 = scmp.lt.s32.totalorder %s13, 1
          %s162 = scalar_select %p161, %s13, 1
          %s163 = smul.addr %s162, 4
          %s164 = scalar_lea.vmem %s0, %s163
        $region28: #{tpu_custom_call.1} parent=23 // pred_fallthru
          _
        // Predicated region
        $region29: #{tpu_custom_call.1} parent=23 // pred_check
          %p165 = pneg %p101
        $region30: #{tpu_custom_call.1} parent=23 // pred_check_branch
          %167 = sbr.rel (%p165) target = $region32
        $region31: #{tpu_custom_call.1} parent=23 // pred_region
          %p168 = scmp.lt.s32.totalorder %s13, 1
          %s169 = scalar_select %p168, %s13, 1
          %s170 = smul.addr %s169, 4
          %s171 = scalar_lea.vmem %s3, %s170
        $region32: #{tpu_custom_call.1} parent=23 // pred_fallthru
          _
      $region24: #{tpu_custom_call.1} parent=5 // pred_fallthru
        _
      %p172 = scmp.le.s32.totalorder 1, %s13
      %p173 = scmp.lt.s32.totalorder %s13, 3
      %p174 = pnand %p172, %p173
      %p175 = pneg %p174
      // Predicated region
      $region33: #{tpu_custom_call.1} parent=5 // pred_check
        _
      $region34: #{tpu_custom_call.1} parent=5 // pred_check_branch
        %177 = sbr.rel (%p174) target = $region36
      $region35: #{tpu_custom_call.1} parent=5 // pred_region
        %s178 = ssub.s32 %s13, 1
        %p179 = scmp.lt.s32.totalorder %s18, 1
        %s180 = scalar_select %p179, %s18, 1
        %s181 = smul.addr %s180, 4
        %s182 = scalar_lea.vmem %s0, %s181
        %p183 = pneg %p39
        %p184 = pneg %p36
        %p185 = pneg %p60
        %p186 = pneg %p57
        %p187 = pneg %p81
        %p188 = pneg %p78
        %p189 = scmp.lt.s32.totalorder %s18, 1
        %s190 = scalar_select %p189, %s18, 1
        %s191 = smul.addr %s190, 4
        %s192 = scalar_lea.vmem %s3, %s191
        %p193 = pneg %p107
        %p194 = pneg %p104
        %p195 = pneg %p133
        %p196 = pneg %p130
        %s197 = sand.u32 %s120, 1
        %s198 = scalar_lea.sflag [#allocation3], %s197
        %s199 = sand.u32 %s120, 1
        %s200 = smul.addr %s199, 4
        %s201 = scalar_lea.vmem [#allocation2], %s200
        %p202 = scmp.lt.s32.totalorder %s18, 1
        %s203 = scalar_select %p202, %s18, 1
        %s204 = smul.addr %s203, 4
        %s205 = scalar_lea.vmem %s0, %s204
        %p206 = scmp.lt.s32.totalorder %s18, 1
        %s207 = scalar_select %p206, %s18, 1
        %s208 = smul.addr %s207, 4
        %s209 = scalar_lea.vmem %s3, %s208
        %v210 = vld [vmem:[%s205] sm:$0xf]
        %v211 = vld [vmem:[%s1] sm:$0xff]
        %s212 = scalar_lea.vmem %s1, 8
        %v213 = vld [vmem:[%s212] sm:$0xff]
        %215 = vrot.lane.b32.xlu0 %v210, 127
        %v216 = vpop.permute.xlu0 %215
        %vm217 = vcmask 31744
        %v219 = vsel %vm217, %v213, 0
        %vm221 = vcmask 1043456
        %v222 = vsel %vm221, %v216, 0
        %224 = vmatprep.subr.mxu0 0.0
        %225 = vmatpush1.msra.mxu0 %v222
        %226 = vmatprep.subr.mxu0 0.0
        %227 = vmatpush1.msra.mxu0 0.0
        %228 = vmatprep.subr.mxu0 0.0
        %229 = vmatpush1.msra.mxu0 0.0
        %230 = vmatprep.subr.mxu0 0.0
        %231 = vmatpush1.msra.mxu0 0.0
        %232 = vmatprep.subr.mxu0 0.0
        %233 = vmatpush1.msra.mxu0 0.0
        %234 = vmatprep.subr.mxu0 0.0
        %235 = vmatpush1.msra.mxu0 0.0
        %236 = vmatprep.subr.mxu0 0.0
        %237 = vmatpush1.msra.mxu0 0.0
        %238 = vmatprep.subr.mxu0 0.0
        %239 = vmatpush1.msra.mxu0 0.0
        %240 = vmatprep.subr.mxu0 0.0
        %241 = vmatpush1.msra.mxu0 0.0
        %242 = vmatprep.subr.mxu0 0.0
        %243 = vmatpush1.msra.mxu0 0.0
        %244 = vmatprep.subr.mxu0 0.0
        %245 = vmatpush1.msra.mxu0 0.0
        %246 = vmatprep.subr.mxu0 0.0
        %247 = vmatpush1.msra.mxu0 0.0
        %248 = vmatprep.subr.mxu0 0.0
        %249 = vmatpush1.msra.mxu0 0.0
        %250 = vmatprep.subr.mxu0 0.0
        %251 = vmatpush1.msra.mxu0 0.0
        %252 = vmatprep.subr.mxu0 0.0
        %253 = vmatpush1.msra.mxu0 0.0
        %254 = vmatprep.subr.mxu0 0.0
        %255 = vmatpush1.msra.mxu0 0.0
        %256 = vmatprep.subr.mxu0 0.0
        %257 = vmatpush1.msra.mxu0 0.0
        %258 = vmatprep.subr.mxu0 0.0
        %259 = vmatpush1.msra.mxu0 0.0
        %260 = vmatprep.subr.mxu0 0.0
        %261 = vmatpush1.msra.mxu0 0.0
        %262 = vmatprep.subr.mxu0 0.0
        %263 = vmatpush1.msra.mxu0 0.0
        %264 = vmatprep.subr.mxu0 0.0
        %265 = vmatpush1.msra.mxu0 0.0
        %266 = vmatprep.subr.mxu0 0.0
        %267 = vmatpush1.msra.mxu0 0.0
        %268 = vmatprep.subr.mxu0 0.0
        %269 = vmatpush1.msra.mxu0 0.0
        %270 = vmatprep.subr.mxu0 0.0
        %271 = vmatpush1.msra.mxu0 0.0
        %272 = vmatprep.subr.mxu0 0.0
        %273 = vmatpush1.msra.mxu0 0.0
        %274 = vmatprep.subr.mxu0 0.0
        %275 = vmatpush1.msra.mxu0 0.0
        %276 = vmatprep.subr.mxu0 0.0
        %277 = vmatpush1.msra.mxu0 0.0
        %278 = vmatprep.subr.mxu0 0.0
        %279 = vmatpush1.msra.mxu0 0.0
        %280 = vmatprep.subr.mxu0 0.0
        %281 = vmatpush1.msra.mxu0 0.0
        %282 = vmatprep.subr.mxu0 0.0
        %283 = vmatpush1.msra.mxu0 0.0
        %284 = vmatprep.subr.mxu0 0.0
        %285 = vmatpush1.msra.mxu0 0.0
        %286 = vmatprep.subr.mxu0 0.0
        %287 = vmatpush1.msra.mxu0 0.0
        %288 = vmatprep.mubr.f32.mxu0 0.0
        %289 = vmatmul.mubr.f32.gmra.mrb[0].mxu0 %v219
        %v290 = vpop.f32.mrb[0].mxu0
        %v291 = vadd.f32 0.0, %v290
        %v292 = vpop.f32.mrb[0].mxu0
        %293 = vdwg.mxu0
        %v295 = vsel %vm217, %v211, 0
        %v297 = vsel %vm221, %v210, 0
        %299 = vmatprep.subr.mxu0 0.0
        %300 = vmatpush1.msra.mxu0 %v297
        %301 = vmatprep.subr.mxu0 0.0
        %302 = vmatpush1.msra.mxu0 0.0
        %303 = vmatprep.subr.mxu0 0.0
        %304 = vmatpush1.msra.mxu0 0.0
        %305 = vmatprep.subr.mxu0 0.0
        %306 = vmatpush1.msra.mxu0 0.0
        %307 = vmatprep.subr.mxu0 0.0
        %308 = vmatpush1.msra.mxu0 0.0
        %309 = vmatprep.subr.mxu0 0.0
        %310 = vmatpush1.msra.mxu0 0.0
        %311 = vmatprep.subr.mxu0 0.0
        %312 = vmatpush1.msra.mxu0 0.0
        %313 = vmatprep.subr.mxu0 0.0
        %314 = vmatpush1.msra.mxu0 0.0
        %315 = vmatprep.subr.mxu0 0.0
        %316 = vmatpush1.msra.mxu0 0.0
        %317 = vmatprep.subr.mxu0 0.0
        %318 = vmatpush1.msra.mxu0 0.0
        %319 = vmatprep.subr.mxu0 0.0
        %320 = vmatpush1.msra.mxu0 0.0
        %321 = vmatprep.subr.mxu0 0.0
        %322 = vmatpush1.msra.mxu0 0.0
        %323 = vmatprep.subr.mxu0 0.0
        %324 = vmatpush1.msra.mxu0 0.0
        %325 = vmatprep.subr.mxu0 0.0
        %326 = vmatpush1.msra.mxu0 0.0
        %327 = vmatprep.subr.mxu0 0.0
        %328 = vmatpush1.msra.mxu0 0.0
        %329 = vmatprep.subr.mxu0 0.0
        %330 = vmatpush1.msra.mxu0 0.0
        %331 = vmatprep.subr.mxu0 0.0
        %332 = vmatpush1.msra.mxu0 0.0
        %333 = vmatprep.subr.mxu0 0.0
        %334 = vmatpush1.msra.mxu0 0.0
        %335 = vmatprep.subr.mxu0 0.0
        %336 = vmatpush1.msra.mxu0 0.0
        %337 = vmatprep.subr.mxu0 0.0
        %338 = vmatpush1.msra.mxu0 0.0
        %339 = vmatprep.subr.mxu0 0.0
        %340 = vmatpush1.msra.mxu0 0.0
        %341 = vmatprep.subr.mxu0 0.0
        %342 = vmatpush1.msra.mxu0 0.0
        %343 = vmatprep.subr.mxu0 0.0
        %344 = vmatpush1.msra.mxu0 0.0
        %345 = vmatprep.subr.mxu0 0.0
        %346 = vmatpush1.msra.mxu0 0.0
        %347 = vmatprep.subr.mxu0 0.0
        %348 = vmatpush1.msra.mxu0 0.0
        %349 = vmatprep.subr.mxu0 0.0
        %350 = vmatpush1.msra.mxu0 0.0
        %351 = vmatprep.subr.mxu0 0.0
        %352 = vmatpush1.msra.mxu0 0.0
        %353 = vmatprep.subr.mxu0 0.0
        %354 = vmatpush1.msra.mxu0 0.0
        %355 = vmatprep.subr.mxu0 0.0
        %356 = vmatpush1.msra.mxu0 0.0
        %357 = vmatprep.subr.mxu0 0.0
        %358 = vmatpush1.msra.mxu0 0.0
        %359 = vmatprep.subr.mxu0 0.0
        %360 = vmatpush1.msra.mxu0 0.0
        %361 = vmatprep.subr.mxu0 0.0
        %362 = vmatpush1.msra.mxu0 0.0
        %363 = vmatprep.mubr.f32.mxu0 0.0
        %364 = vmatmul.mubr.f32.gmra.mrb[0].mxu0 %v295
        %v365 = vpop.f32.mrb[0].mxu0
        %v366 = vadd.f32 %v291, %v365
        %v367 = vpop.f32.mrb[0].mxu0
        %368 = vdwg.mxu0
        %s369 = scalar_lea.vmem %s1, 16
        %v370 = vld [vmem:[%s369] sm:$0xff]
        %371 = vrot.lane.b32.xlu0 %v210, 126
        %v372 = vpop.permute.xlu0 %371
        %v374 = vsel %vm217, %v370, 0
        %v376 = vsel %vm221, %v372, 0
        %378 = vmatprep.subr.mxu0 0.0
        %379 = vmatpush1.msra.mxu0 %v376
        %380 = vmatprep.subr.mxu0 0.0
        %381 = vmatpush1.msra.mxu0 0.0
        %382 = vmatprep.subr.mxu0 0.0
        %383 = vmatpush1.msra.mxu0 0.0
        %384 = vmatprep.subr.mxu0 0.0
        %385 = vmatpush1.msra.mxu0 0.0
        %386 = vmatprep.subr.mxu0 0.0
        %387 = vmatpush1.msra.mxu0 0.0
        %388 = vmatprep.subr.mxu0 0.0
        %389 = vmatpush1.msra.mxu0 0.0
        %390 = vmatprep.subr.mxu0 0.0
        %391 = vmatpush1.msra.mxu0 0.0
        %392 = vmatprep.subr.mxu0 0.0
        %393 = vmatpush1.msra.mxu0 0.0
        %394 = vmatprep.subr.mxu0 0.0
        %395 = vmatpush1.msra.mxu0 0.0
        %396 = vmatprep.subr.mxu0 0.0
        %397 = vmatpush1.msra.mxu0 0.0
        %398 = vmatprep.subr.mxu0 0.0
        %399 = vmatpush1.msra.mxu0 0.0
        %400 = vmatprep.subr.mxu0 0.0
        %401 = vmatpush1.msra.mxu0 0.0
        %402 = vmatprep.subr.mxu0 0.0
        %403 = vmatpush1.msra.mxu0 0.0
        %404 = vmatprep.subr.mxu0 0.0
        %405 = vmatpush1.msra.mxu0 0.0
        %406 = vmatprep.subr.mxu0 0.0
        %407 = vmatpush1.msra.mxu0 0.0
        %408 = vmatprep.subr.mxu0 0.0
        %409 = vmatpush1.msra.mxu0 0.0
        %410 = vmatprep.subr.mxu0 0.0
        %411 = vmatpush1.msra.mxu0 0.0
        %412 = vmatprep.subr.mxu0 0.0
        %413 = vmatpush1.msra.mxu0 0.0
        %414 = vmatprep.subr.mxu0 0.0
        %415 = vmatpush1.msra.mxu0 0.0
        %416 = vmatprep.subr.mxu0 0.0
        %417 = vmatpush1.msra.mxu0 0.0
        %418 = vmatprep.subr.mxu0 0.0
        %419 = vmatpush1.msra.mxu0 0.0
        %420 = vmatprep.subr.mxu0 0.0
        %421 = vmatpush1.msra.mxu0 0.0
        %422 = vmatprep.subr.mxu0 0.0
        %423 = vmatpush1.msra.mxu0 0.0
        %424 = vmatprep.subr.mxu0 0.0
        %425 = vmatpush1.msra.mxu0 0.0
        %426 = vmatprep.subr.mxu0 0.0
        %427 = vmatpush1.msra.mxu0 0.0
        %428 = vmatprep.subr.mxu0 0.0
        %429 = vmatpush1.msra.mxu0 0.0
        %430 = vmatprep.subr.mxu0 0.0
        %431 = vmatpush1.msra.mxu0 0.0
        %432 = vmatprep.subr.mxu0 0.0
        %433 = vmatpush1.msra.mxu0 0.0
        %434 = vmatprep.subr.mxu0 0.0
        %435 = vmatpush1.msra.mxu0 0.0
        %436 = vmatprep.subr.mxu0 0.0
        %437 = vmatpush1.msra.mxu0 0.0
        %438 = vmatprep.subr.mxu0 0.0
        %439 = vmatpush1.msra.mxu0 0.0
        %440 = vmatprep.subr.mxu0 0.0
        %441 = vmatpush1.msra.mxu0 0.0
        %442 = vmatprep.mubr.f32.mxu0 0.0
        %443 = vmatmul.mubr.f32.gmra.mrb[0].mxu0 %v374
        %v444 = vpop.f32.mrb[0].mxu0
        %v445 = vadd.f32 0.0, %v444
        %v446 = vpop.f32.mrb[0].mxu0
        %447 = vdwg.mxu0
        %v448 = vadd.f32 %v366, %v445
        %v449 = vld [vmem:[%s2] sm:$0xff]
        %451 = vset.pattern.permute.xlu0 0
        %452 = vperm.xlu0 %451, %v449
        %v453 = vpop.permute.xlu0 %452
        %v455 = vadd.f32 %v448, %v453
        %v456 = vxor.u32 %v455, 2147483648
        %v457 = vmul.f32 %v456, 1.442695
        %v458 = vpow.pop %v457
        %v459 = vadd.f32 %v458, 1.0
        %v460 = vrcp.pop %v459
        %v461 = vmul.f32 1.0, %v460
        %v463 = vrot.slane %v461, 4
        %v465 = vmul.f32 %v455, %v463
        %v466 = vld [vmem:[%s209] sm:$0xf]
        %v467 = vadd.f32 %v466, %v465
        %vm468 = vcmask 125952
        %469 = vst.msk [vmem:[%s201] sm:$0xf] %vm468, %v467
        %s470 = sand.u32 %s120, 1
        %s471 = scalar_lea.sflag [#allocation3], %s470
        %s472 = sand.u32 %s120, 1
        %s473 = smul.addr %s472, 4
        %s474 = scalar_lea.vmem [#allocation2], %s473
        // Predicated region
        $region37: #{tpu_custom_call.1} parent=35 // pred_check
          %p475 = pneg %p130
        $region38: #{tpu_custom_call.1} parent=35 // pred_check_branch
          %477 = sbr.rel (%p475) target = $region40
        $region39: #{tpu_custom_call.1} parent=35 // pred_region
          %s479 = ssub.s32 64, 64
          %480 = vsyncadd %s471, %s479
          %s481 = smul.addr %s18, 64
          %s482 = scalar_lea.hbm %s4, %s481
          %s484 = sshll.u32 %s474, 4
          %s485 = int_to_ptr.vmem [resolvable:$true] %s484
          %487 = dma.vmem_to_hbm [thread:$0]  %s485, 64, %s482, %s471
        $region40: #{tpu_custom_call.1} parent=35 // pred_fallthru
          _
      $region36: #{tpu_custom_call.1} parent=5 // pred_fallthru
        _
      %p488 = scmp.le.s32.totalorder 2, %s13
      // Predicated region
      $region41: #{tpu_custom_call.1} parent=5 // pred_check
        %p489 = pneg %p488
      $region42: #{tpu_custom_call.1} parent=5 // pred_check_branch
        %491 = sbr.rel (%p489) target = $region44
      $region43: #{tpu_custom_call.1} parent=5 // pred_region
        %s492 = ssub.s32 %s13, 2
        // Predicated region
        $region45: #{tpu_custom_call.1} parent=43 // pred_check
          %p493 = pneg %p136
        $region46: #{tpu_custom_call.1} parent=43 // pred_check_branch
          %495 = sbr.rel (%p493) target = $region48
        $region47: #{tpu_custom_call.1} parent=43 // pred_region
          %s496 = sand.u32 %s121, 1
          %s497 = scalar_lea.sflag [#allocation3], %s496
          %s498 = sand.u32 %s121, 1
          %s499 = smul.addr %s498, 4
          %s500 = scalar_lea.vmem [#allocation2], %s499
          %501 = dma.done %s497, 64
        $region48: #{tpu_custom_call.1} parent=43 // pred_fallthru
          _
      $region44: #{tpu_custom_call.1} parent=5 // pred_fallthru
        _
    $region6: #{tpu_custom_call.1} parent=1 // loop_footer
      %s17 = sadd.s32 1, %s13
    $region7: #{tpu_custom_call.1} parent=1 // loop_footer_branch
      %12 = sbr.rel target = $region3
    $region8: #{tpu_custom_call.1} parent=1 // loop_exit
      _
    %502 = vsyncpa [#allocation3], 1
    %s503 = scalar_lea.sflag [#allocation3], 1
    %504 = vsyncpa %s503, 1

</llo_original>
